<compile_context>
chip_gen: v7x
topology: tpu7x:2x2x1
jax: 0.10.0
libtpu: 0.0.40
codegen_flags: <defaults>
</compile_context>

<pallas_src>
import jax
import jax.numpy as jnp
from jax.experimental import pallas as pl
from jax.experimental.pallas import tpu as pltpu


# ----------------------------------------------------------------------------
# Kernels
# ----------------------------------------------------------------------------
def _masked_softmax_kernel(x_ref, mask_ref, o_ref):
    x = x_ref[...].astype(jnp.float32)
    valid = mask_ref[...] != 0                       # cheap VPU compare (any dtype)
    x_masked = jnp.where(valid, x, -jnp.inf)         # select, no 1/mask divide
    x_max = jnp.max(x_masked, axis=1, keepdims=True)
    x_exp = jnp.exp(x_masked - x_max)                # masked lanes -> exactly 0
    denom = jnp.sum(x_exp, axis=1, keepdims=True)
    inv = pl.reciprocal(denom, approx=False)         # exact: keeps 1e-5 tolerance
    o_ref[...] = (x_exp * inv).astype(o_ref.dtype)


def _softmax_kernel(x_ref, o_ref):
    x = x_ref[...].astype(jnp.float32)
    x_max = jnp.max(x, axis=1, keepdims=True)
    x_exp = jnp.exp(x - x_max)
    denom = jnp.sum(x_exp, axis=1, keepdims=True)
    inv = pl.reciprocal(denom, approx=False)
    o_ref[...] = (x_exp * inv).astype(o_ref.dtype)


# ----------------------------------------------------------------------------
# Tiling heuristics
# ----------------------------------------------------------------------------
def _sublane_multiple(itemsize):
    # native sublane packing: f32 -> 8, bf16 -> 16, int8/bool -> 32
    return {4: 8, 2: 16, 1: 32}.get(int(itemsize), 8)


def _pick_batch_tile(B, N, in_itemsizes, out_itemsize):
    """Largest batch tile that (a) divides B, (b) respects sublane packing of
    every streamed array, (c) keeps the double-buffered VMEM footprint modest
    (fits v5e/v6e/v7x scoped limits), and (d) leaves >=2 grid steps when
    possible so the v7x megacore can shard the batch axis."""
    sub = max(_sublane_multiple(s) for s in tuple(in_itemsizes) + (out_itemsize,))
    if B <= sub:
        return B
    row_bytes = N * (sum(in_itemsizes) + out_itemsize)
    tb = min(
        (2 << 20) // max(1, N * in_itemsizes[0]),   # ~2 MiB of x per step
        (8 << 20) // max(1, row_bytes),             # <=16 MiB double-buffered
        B,
    )
    if B >= 2 * sub:
        tb = min(tb, B // 2)                        # keep >=2 parallel steps
    tb = max(sub, (tb // sub) * sub)                # sublane-aligned block
    while tb > sub and B % tb != 0:                 # block must divide batch
        tb -= sub
    if B % tb != 0:
        tb = B                                      # full-dim block always legal
    return tb


# ----------------------------------------------------------------------------
# Wrapper
# ----------------------------------------------------------------------------
@jax.jit
def masked_softmax(x, mask=None):
    """Pallas implementation of MaskedSoftmax.forward.

    x:    [batch, num_items] float
    mask: [batch, num_items] (bool / int8 / any dtype; treated as !=0), or None.
    Fully-masked rows return NaN, matching the PyTorch reference (0/0).
    """
    B, N = x.shape
    out_dtype = x.dtype

    if mask is not None and mask.dtype == jnp.bool_:
        mask = mask.astype(jnp.int8)  # keep the mask narrow; never widen to f32

    if mask is None:
        in_itemsizes = (x.dtype.itemsize,)
    else:
        in_itemsizes = (x.dtype.itemsize, mask.dtype.itemsize)

    tb = _pick_batch_tile(B, N, in_itemsizes, out_dtype.itemsize)
    grid = (B // tb,)
    row_spec = pl.BlockSpec((tb, N), lambda i: (i, 0))

    compiler_params = pltpu.CompilerParams(
        dimension_semantics=("parallel",),
        vmem_limit_bytes=32 * 1024 * 1024,  # above v5e's 16 MiB default, safe on v7x
    )

    if mask is None:
        return pl.pallas_call(
            _softmax_kernel,
            out_shape=jax.ShapeDtypeStruct((B, N), out_dtype),
            grid=grid,
            in_specs=[row_spec],
            out_specs=row_spec,
            compiler_params=compiler_params,
        )(x)

    return pl.pallas_call(
        _masked_softmax_kernel,
        out_shape=jax.ShapeDtypeStruct((B, N), out_dtype),
        grid=grid,
        in_specs=[row_spec, row_spec],
        out_specs=row_spec,
        compiler_params=compiler_params,
    )(x, mask)

# TODO(synk): for num_items in the tens of thousands, add an N-tiled two-pass
# (online-softmax) variant so a single row tile always stays within VMEM.


# ----------------------------------------------------------------------------
# Pure-JAX reference mirroring the PyTorch forward exactly
# ----------------------------------------------------------------------------
def _reference(x, mask=None):
    if mask is not None:
        mask = mask.astype(jnp.float32)
        x_masked = x * mask + (1.0 - 1.0 / mask)
    else:
        x_masked = x
    x_max = jnp.max(x_masked, axis=1)
    x_exp = jnp.exp(x - x_max[:, None])
    if mask is not None:
        x_exp = x_exp * mask
    return x_exp / jnp.sum(x_exp, axis=1)[:, None]


if __name__ == "__main__":
    key = jax.random.PRNGKey(0)
    kx, km = jax.random.split(key)

    B, N = 64, 128  # [batch_size, num_items]; exercises a multi-step grid
    x = jax.random.normal(kx, (B, N), dtype=jnp.float32)
    # Random 0/1 mask (kept narrow as int8); force column 0 to 1 so every row
    # has at least one valid item.
    mask = (jax.random.uniform(km, (B, N)) > 0.3).astype(jnp.int8)
    mask = mask.at[:, 0].set(1)

    out_masked = jax.block_until_ready(masked_softmax(x, mask))
    out_plain = jax.block_until_ready(masked_softmax(x, None))

    ref_masked = _reference(x, mask)
    ref_plain = _reference(x, None)

    assert jnp.allclose(out_masked, ref_masked, atol=1e-5, rtol=1e-5)
    assert jnp.allclose(out_plain, ref_plain, atol=1e-5, rtol=1e-5)
    assert jnp.allclose(jnp.sum(out_masked, axis=1), 1.0, atol=1e-5)
    # masked positions must be exactly zero
    assert jnp.all(jnp.where(mask == 0, out_masked, 0.0) == 0.0)

    print("KERNEL_OK")
</pallas_src>

<mosaic_0001>
module attributes {stable_mosaic.version = 11 : i64} {
  func.func @_masked_softmax_kernel(%arg0: i32, %arg1: memref<32x128xf32, #tpu.memory_space<vmem>>, %arg2: memref<32x128xi8, #tpu.memory_space<vmem>>, %arg3: memref<32x128xf32, #tpu.memory_space<vmem>>) attributes {dimension_semantics = [#tpu.dimension_semantics<parallel>], iteration_bounds = array<i64: 2>, scalar_prefetch = 0 : i64, scratch_operands = 0 : i64, tpu.core_type = #tpu.core_type<tc>, window_params = [{transform_indices = @transform_0, window_bounds = array<i64: 32, 128>}, {transform_indices = @transform_1, window_bounds = array<i64: 32, 128>}, {transform_indices = @transform_2, window_bounds = array<i64: 32, 128>}]} {
    %c0 = arith.constant 0 : index
    %c0_0 = arith.constant 0 : index
    %0 = vector.load %arg1[%c0, %c0_0] : memref<32x128xf32, #tpu.memory_space<vmem>>, vector<32x128xf32>
    %c0_1 = arith.constant 0 : index
    %c0_2 = arith.constant 0 : index
    %1 = vector.load %arg2[%c0_1, %c0_2] : memref<32x128xi8, #tpu.memory_space<vmem>>, vector<32x128xi8>
    %c0_i8 = arith.constant 0 : i8
    %2 = vector.broadcast %c0_i8 : i8 to vector<32x128xi8>
    %3 = arith.cmpi ne, %1, %2 : vector<32x128xi8>
    %cst = arith.constant 0xFF800000 : f32
    %4 = vector.broadcast %cst : f32 to vector<32x128xf32>
    %5 = arith.select %3, %0, %4 : vector<32x128xi1>, vector<32x128xf32>
    %cst_3 = arith.constant dense<0xFF800000> : vector<32xf32>
    %6 = vector.multi_reduction <maximumf>, %5, %cst_3 [1] : vector<32x128xf32> to vector<32xf32>
    %7 = vector.shape_cast %6 : vector<32xf32> to vector<32x1xf32>
    %8 = vector.broadcast %7 : vector<32x1xf32> to vector<32x128xf32>
    %9 = arith.subf %5, %8 : vector<32x128xf32>
    %10 = math.exp %9 : vector<32x128xf32>
    %cst_4 = arith.constant dense<0.000000e+00> : vector<32xf32>
    %11 = vector.multi_reduction <add>, %10, %cst_4 [1] : vector<32x128xf32> to vector<32xf32>
    %12 = vector.shape_cast %11 : vector<32xf32> to vector<32x1xf32>
    %13 = tpu.reciprocal %12 : vector<32x1xf32> -> vector<32x1xf32>
    %14 = vector.broadcast %13 : vector<32x1xf32> to vector<32x128xf32>
    %15 = arith.mulf %10, %14 : vector<32x128xf32>
    %c0_5 = arith.constant 0 : index
    %c0_6 = arith.constant 0 : index
    %16 = vector.load %arg3[%c0_5, %c0_6] : memref<32x128xf32, #tpu.memory_space<vmem>>, vector<32x128xf32>
    tpu.vector_store %arg3[%c0_5, %c0_6], %15 {strides = array<i32>} : memref<32x128xf32, #tpu.memory_space<vmem>>, vector<32x128xf32>,
    return
  }
  func.func @transform_0(%arg0: i32) -> (i32, i32) {
    %c0_i32 = arith.constant 0 : i32
    %c0_i32_0 = arith.constant 0 : i32
    return %arg0, %c0_i32 : i32, i32
  }
  func.func @transform_1(%arg0: i32) -> (i32, i32) {
    %c0_i32 = arith.constant 0 : i32
    %c0_i32_0 = arith.constant 0 : i32
    return %arg0, %c0_i32 : i32, i32
  }
  func.func @transform_2(%arg0: i32) -> (i32, i32) {
    %c0_i32 = arith.constant 0 : i32
    %c0_i32_0 = arith.constant 0 : i32
    return %arg0, %c0_i32 : i32, i32
  }
}

</mosaic_0001>

<llo_original>
// kernel: masked_softmax.1
$region0: #{masked_softmax.1}
  #allocation0 [shape = 'u32[]', space=smem, size = 0x4, offset = 0x4, fixed_abs, tag = 'smem constant byte address 0x4 - core index']
  #allocation1 [shape = 'u32[144,128]{1,0:T(1,128)}', space=vmem, size = 0x12000, scoped, tag = 'internal scratch']
  %s0 = inlined_call_operand.hbm [shape: f32[64,128], index: 0, kind: input, shape index: {}]
  %s1 = inlined_call_operand.hbm [shape: s8[64,128], index: 1, kind: input, shape index: {}]
  %s2 = inlined_call_operand.hbm [shape: f32[64,128], index: 2, kind: output, shape index: {}]
  %s3 = sld [smem:[#allocation0]]
  $region49: #{masked_softmax.1} parent=0
    _
  %s5 = ssub.s32 1, %s3
  %s6 = scalar_select 0, %s5, %s3
  $region1: #{masked_softmax.1} parent=0
    #allocation2 [shape = 'u8[32768]{0}', space=vmem, size = 0x8000, scoped, tag = 'input window, operand 0']
    #allocation3 [shape = 's32[2]{0}', space=sflag, size = 0x8, scoped, tag = 'scoped memory for masked_softmax.1']
    #allocation4 [shape = 's32[2]{0}', space=sflag, size = 0x8, scoped, tag = 'scoped memory for masked_softmax.1']
    #allocation5 [shape = 'u8[8192]{0}', space=vmem, size = 0x2000, scoped, tag = 'input window, operand 1']
    #allocation6 [shape = 's32[2]{0}', space=sflag, size = 0x8, scoped, tag = 'scoped memory for masked_softmax.1']
    #allocation7 [shape = 'u8[32768]{0}', space=vmem, size = 0x8000, scoped, tag = 'output window, operand 0']
    %7 = vsyncpa [#allocation3], 0
    %s8 = scalar_lea.sflag [#allocation3], 1
    %9 = vsyncpa %s8, 0
    %10 = vsyncpa [#allocation6], 0
    %s11 = scalar_lea.sflag [#allocation6], 1
    %12 = vsyncpa %s11, 0
    %13 = vsyncpa [#allocation4], 0
    %s14 = scalar_lea.sflag [#allocation4], 1
    %15 = vsyncpa %s14, 0
    loop: start=0, step=1, limit=4
    $region2: #{masked_softmax.1} parent=1 // loop_pre_header
      _
    $region3: #{masked_softmax.1} parent=1 // loop_header
      %s17 = sphi 0, %s21
      %p18 = scmp.ge.s32.totalorder %s17, 4
      %s27 = sphi 0, %s29
      %s30 = sphi 0, %s27
      %s31 = sphi 0, %s30
      %s47 = sphi 0, %s31
      %s53 = sphi 0, %s55
      %s56 = sphi 0, %s53
      %s57 = sphi 0, %s56
      %s73 = sphi 0, %s57
      %s79 = sphi 0, %s81
      %s82 = sphi 0, %s79
      %s83 = sphi 0, %s82
      %s99 = sphi 0, %s83
    $region4: #{masked_softmax.1} parent=1 // loop_header_branch
      %20 = sbr.rel (%p18) target = $region8
    $region5: #{masked_softmax.1} parent=1 // loop_body
      %s22 = ssub.s32 %s17, 1
      %s23 = ssub.s32 %s17, 2
      %s24 = sadd.s32 %s17, 1
      %s25 = ssub.s32 %s17, %s24
      %p26 = scmp.eq.s32.totalorder %s25, 0
      %s28 = sadd.s32 %s27, 1
      %s29 = scalar_select %p26, %s27, %s28
      %p32 = pneg %p26
      %p33 = scmp.eq.s32.totalorder %s17, 1
      %p34 = por %p32, %p33
      %p35 = scmp.ne.s32.totalorder %s27, %s30
      %p36 = scmp.eq.s32.totalorder %s17, 0
      %p37 = por %p35, %p36
      %p38 = scmp.ne.s32.totalorder %s27, %s30
      %p39 = scmp.eq.s32.totalorder %s22, 1
      %p40 = por %p38, %p39
      %p41 = scmp.ne.s32.totalorder %s30, %s31
      %p42 = scmp.eq.s32.totalorder %s22, 0
      %p43 = por %p41, %p42
      %p44 = scmp.ne.s32.totalorder %s30, %s31
      %p45 = scmp.eq.s32.totalorder %s23, 1
      %p46 = por %p44, %p45
      %p48 = scmp.ne.s32.totalorder %s31, %s47
      %p49 = scmp.eq.s32.totalorder %s23, 0
      %p50 = por %p48, %p49
      %s51 = ssub.s32 %s17, %s24
      %p52 = scmp.eq.s32.totalorder %s51, 0
      %s54 = sadd.s32 %s53, 1
      %s55 = scalar_select %p52, %s53, %s54
      %p58 = pneg %p52
      %p59 = scmp.eq.s32.totalorder %s17, 1
      %p60 = por %p58, %p59
      %p61 = scmp.ne.s32.totalorder %s53, %s56
      %p62 = scmp.eq.s32.totalorder %s17, 0
      %p63 = por %p61, %p62
      %p64 = scmp.ne.s32.totalorder %s53, %s56
      %p65 = scmp.eq.s32.totalorder %s22, 1
      %p66 = por %p64, %p65
      %p67 = scmp.ne.s32.totalorder %s56, %s57
      %p68 = scmp.eq.s32.totalorder %s22, 0
      %p69 = por %p67, %p68
      %p70 = scmp.ne.s32.totalorder %s56, %s57
      %p71 = scmp.eq.s32.totalorder %s23, 1
      %p72 = por %p70, %p71
      %p74 = scmp.ne.s32.totalorder %s57, %s73
      %p75 = scmp.eq.s32.totalorder %s23, 0
      %p76 = por %p74, %p75
      %s77 = ssub.s32 %s17, %s24
      %p78 = scmp.eq.s32.totalorder %s77, 0
      %s80 = sadd.s32 %s79, 1
      %s81 = scalar_select %p78, %s79, %s80
      %p84 = pneg %p78
      %p85 = scmp.eq.s32.totalorder %s17, 1
      %p86 = por %p84, %p85
      %p87 = scmp.ne.s32.totalorder %s79, %s82
      %p88 = scmp.eq.s32.totalorder %s17, 0
      %p89 = por %p87, %p88
      %p90 = scmp.ne.s32.totalorder %s79, %s82
      %p91 = scmp.eq.s32.totalorder %s22, 1
      %p92 = por %p90, %p91
      %p93 = scmp.ne.s32.totalorder %s82, %s83
      %p94 = scmp.eq.s32.totalorder %s22, 0
      %p95 = por %p93, %p94
      %p96 = scmp.ne.s32.totalorder %s82, %s83
      %p97 = scmp.eq.s32.totalorder %s23, 1
      %p98 = por %p96, %p97
      %p100 = scmp.ne.s32.totalorder %s83, %s99
      %p101 = scmp.eq.s32.totalorder %s23, 0
      %p102 = por %p100, %p101
      %p103 = scmp.le.s32.totalorder 1, %s17
      %p104 = scmp.lt.s32.totalorder %s17, 3
      %p105 = pnand %p103, %p104
      %p106 = pneg %p105
      // Predicated region
      $region9: #{masked_softmax.1} parent=5 // pred_check
        _
      $region10: #{masked_softmax.1} parent=5 // pred_check_branch
        %108 = sbr.rel (%p105) target = $region12
      $region11: #{masked_softmax.1} parent=5 // pred_region
        %s109 = ssub.s32 %s17, 1
      $region12: #{masked_softmax.1} parent=5 // pred_fallthru
        _
      %p110 = scmp.lt.s32.totalorder %s17, 2
      // Predicated region
      $region13: #{masked_softmax.1} parent=5 // pred_check
        %p111 = pneg %p110
      $region14: #{masked_softmax.1} parent=5 // pred_check_branch
        %113 = sbr.rel (%p111) target = $region16
      $region15: #{masked_softmax.1} parent=5 // pred_region
        // Predicated region
        $region17: #{masked_softmax.1} parent=15 // pred_check
          %p114 = pneg %p37
        $region18: #{masked_softmax.1} parent=15 // pred_check_branch
          %116 = sbr.rel (%p114) target = $region20
        $region19: #{masked_softmax.1} parent=15 // pred_region
          %s117 = sand.u32 %s27, 1
          %s118 = scalar_lea.sflag [#allocation3], %s117
          %s119 = sand.u32 %s27, 1
          %s120 = smul.addr %s119, 32
          %s121 = scalar_lea.vmem [#allocation2], %s120
          %s122 = smul.u32 4, %s17
          %s124 = ssub.s32 512, 512
          %125 = vsyncadd %s118, %s124
          %s126 = smul.addr %s122, 128
          %s127 = scalar_lea.hbm %s0, %s126
          %s128 = sshll.u32 %s121, 4
          %s129 = int_to_ptr.vmem [resolvable:$true] %s128
          %134 = dma.hbm_to_vmem [thread:$0]  %s127, 512, %s129, %s118, 128, 128, 8
        $region20: #{masked_softmax.1} parent=15 // pred_fallthru
          _
        // Predicated region
        $region21: #{masked_softmax.1} parent=15 // pred_check
          %p135 = pneg %p63
        $region22: #{masked_softmax.1} parent=15 // pred_check_branch
          %137 = sbr.rel (%p135) target = $region24
        $region23: #{masked_softmax.1} parent=15 // pred_region
          %s138 = sand.u32 %s53, 1
          %s139 = scalar_lea.sflag [#allocation6], %s138
          %s140 = sand.u32 %s53, 1
          %s141 = smul.addr %s140, 8
          %s142 = scalar_lea.vmem [#allocation5], %s141
          %s144 = ssub.s32 128, 128
          %145 = vsyncadd %s139, %s144
          %s146 = smul.addr %s17, 128
          %s147 = scalar_lea.hbm %s1, %s146
          %s149 = sshll.u32 %s142, 4
          %s150 = int_to_ptr.vmem [resolvable:$true] %s149
          %152 = dma.hbm_to_vmem [thread:$0]  %s147, 128, %s150, %s139
        $region24: #{masked_softmax.1} parent=15 // pred_fallthru
          _
      $region16: #{masked_softmax.1} parent=5 // pred_fallthru
        _
      %p153 = scmp.le.s32.totalorder 1, %s17
      %p154 = scmp.lt.s32.totalorder %s17, 3
      %p155 = pnand %p153, %p154
      %p156 = pneg %p155
      // Predicated region
      $region25: #{masked_softmax.1} parent=5 // pred_check
        _
      $region26: #{masked_softmax.1} parent=5 // pred_check_branch
        %158 = sbr.rel (%p155) target = $region28
      $region27: #{masked_softmax.1} parent=5 // pred_region
        %s159 = ssub.s32 %s17, 1
        %s160 = sand.u32 %s30, 1
        %s161 = scalar_lea.sflag [#allocation3], %s160
        %s162 = sand.u32 %s30, 1
        %s163 = smul.addr %s162, 32
        %s164 = scalar_lea.vmem [#allocation2], %s163
        // Predicated region
        $region29: #{masked_softmax.1} parent=27 // pred_check
          %p165 = pneg %p43
        $region30: #{masked_softmax.1} parent=27 // pred_check_branch
          %167 = sbr.rel (%p165) target = $region32
        $region31: #{masked_softmax.1} parent=27 // pred_region
          %168 = dma.done %s161, 512
        $region32: #{masked_softmax.1} parent=27 // pred_fallthru
          _
        %s169 = sand.u32 %s56, 1
        %s170 = scalar_lea.sflag [#allocation6], %s169
        %s171 = sand.u32 %s56, 1
        %s172 = smul.addr %s171, 8
        %s173 = scalar_lea.vmem [#allocation5], %s172
        // Predicated region
        $region33: #{masked_softmax.1} parent=27 // pred_check
          %p174 = pneg %p69
        $region34: #{masked_softmax.1} parent=27 // pred_check_branch
          %176 = sbr.rel (%p174) target = $region36
        $region35: #{masked_softmax.1} parent=27 // pred_region
          %177 = dma.done %s170, 128
        $region36: #{masked_softmax.1} parent=27 // pred_fallthru
          _
        %s178 = sand.u32 %s30, 1
        %s179 = scalar_lea.sflag [#allocation3], %s178
        %s180 = sand.u32 %s30, 1
        %s181 = smul.addr %s180, 32
        %s182 = scalar_lea.vmem [#allocation2], %s181
        %p183 = pneg %p43
        %p184 = pneg %p40
        %s185 = sand.u32 %s56, 1
        %s186 = scalar_lea.sflag [#allocation6], %s185
        %s187 = sand.u32 %s56, 1
        %s188 = smul.addr %s187, 8
        %s189 = scalar_lea.vmem [#allocation5], %s188
        %p190 = pneg %p69
        %p191 = pneg %p66
        %p192 = pneg %p95
        %p193 = pneg %p92
        %s194 = sand.u32 %s82, 1
        %s195 = scalar_lea.sflag [#allocation4], %s194
        %s196 = sand.u32 %s82, 1
        %s197 = smul.addr %s196, 32
        %s198 = scalar_lea.vmem [#allocation7], %s197
        %s199 = smul.u32 4, %s22
        %s200 = smul.u32 4, %s22
        %v203 = vld [vmem:[%s164] sm:$0xff]
        %v204 = vld [vmem:[%s164 + $0x8] sm:$0xff]
        %v205 = vld [vmem:[%s164 + $0x10] sm:$0xff]
        %v206 = vld [vmem:[%s164 + $0x18] sm:$0xff]
        %v207 = vld [vmem:[%s173] sm:$0xff]
        %vm208 = vnez %v207
        %v209 = vsel %vm208, 16843009, 0
        %v210 = vunpack.c.0.s8 %v209
        %v211 = vunpack.c.1.s8 %v209
        %v212 = vunpack.c.2.s8 %v209
        %v213 = vunpack.c.3.s8 %v209
        %v214 = vpack.c.b16 %v210, %v210
        %v215 = vpack.c.b8 %v214, %v214
        %v216 = vpack.c.b16 %v211, %v211
        %v217 = vpack.c.b8 %v216, %v216
        %v218 = vpack.c.b16 %v212, %v212
        %v219 = vpack.c.b8 %v218, %v218
        %v220 = vpack.c.b16 %v213, %v213
        %v221 = vpack.c.b8 %v220, %v220
        %vm222 = vnez %v215
        %vm223 = vnez %v217
        %vm224 = vnez %v219
        %vm225 = vnez %v221
        %v226 = vsel %vm222, 16843009, 0
        %v227 = vsel %vm223, 16843009, 0
        %v228 = vsel %vm224, 16843009, 0
        %v229 = vsel %vm225, 16843009, 0
        %v230 = vunpack.c.0.s8 %v226
        %v231 = vunpack.c.0.s8 %v227
        %v232 = vunpack.c.0.s8 %v228
        %v233 = vunpack.c.0.s8 %v229
        %vm234 = vcmp.ne.s32.totalorder %v230, 0
        %vm235 = vcmp.ne.s32.totalorder %v231, 0
        %vm236 = vcmp.ne.s32.totalorder %v232, 0
        %vm237 = vcmp.ne.s32.totalorder %v233, 0
        %v238 = vsel %vm234, %v203, -inf
        %v239 = vsel %vm235, %v204, -inf
        %v240 = vsel %vm236, %v205, -inf
        %v241 = vsel %vm237, %v206, -inf
        %242 = vmax.xlane.f32.xlu0 %v238
        %v243 = vpop.xlane.xlu0 %242
        %244 = vmax.xlane.f32.xlu0 %v239
        %v245 = vpop.xlane.xlu0 %244
        %246 = vmax.xlane.f32.xlu0 %v240
        %v247 = vpop.xlane.xlu0 %246
        %248 = vmax.xlane.f32.xlu0 %v241
        %v249 = vpop.xlane.xlu0 %248
        %v250 = vsub.f32 %v238, %v243
        %v251 = vsub.f32 %v239, %v245
        %v252 = vsub.f32 %v240, %v247
        %v253 = vsub.f32 %v241, %v249
        %v254 = vmul.f32 %v250, 1.442695
        %v255 = vpow.pop %v254
        %v256 = vmul.f32 %v251, 1.442695
        %v257 = vpow.pop %v256
        %v258 = vmul.f32 %v252, 1.442695
        %v259 = vpow.pop %v258
        %v260 = vmul.f32 %v253, 1.442695
        %v261 = vpow.pop %v260
        %262 = vadd.xlane.f32.xlu0 %v255
        %v263 = vpop.xlane.xlu0 %262
        %264 = vadd.xlane.f32.xlu0 %v257
        %v265 = vpop.xlane.xlu0 %264
        %266 = vadd.xlane.f32.xlu0 %v259
        %v267 = vpop.xlane.xlu0 %266
        %268 = vadd.xlane.f32.xlu0 %v261
        %v269 = vpop.xlane.xlu0 %268
        %v270 = vrcp.pop %v263
        %v271 = vrcp.pop %v265
        %v272 = vrcp.pop %v267
        %v273 = vrcp.pop %v269
        %v274 = vmul.f32 %v255, %v270
        %v275 = vmul.f32 %v257, %v271
        %v276 = vmul.f32 %v259, %v272
        %v277 = vmul.f32 %v261, %v273
        %278 = vst [vmem:[%s198] sm:$0xff] %v274
        %279 = vst [vmem:[%s198 + $0x8] sm:$0xff] %v275
        %280 = vst [vmem:[%s198 + $0x10] sm:$0xff] %v276
        %281 = vst [vmem:[%s198 + $0x18] sm:$0xff] %v277
        %s282 = sand.u32 %s82, 1
        %s283 = scalar_lea.sflag [#allocation4], %s282
        %s284 = sand.u32 %s82, 1
        %s285 = smul.addr %s284, 32
        %s286 = scalar_lea.vmem [#allocation7], %s285
        // Predicated region
        $region37: #{masked_softmax.1} parent=27 // pred_check
          %p287 = pneg %p92
        $region38: #{masked_softmax.1} parent=27 // pred_check_branch
          %289 = sbr.rel (%p287) target = $region40
        $region39: #{masked_softmax.1} parent=27 // pred_region
          %s290 = smul.u32 4, %s22
          %s292 = ssub.s32 512, 512
          %293 = vsyncadd %s283, %s292
          %s294 = smul.addr %s290, 128
          %s295 = scalar_lea.hbm %s2, %s294
          %s296 = sshll.u32 %s286, 4
          %s297 = int_to_ptr.vmem [resolvable:$true] %s296
          %302 = dma.vmem_to_hbm [thread:$0]  %s297, 512, %s295, %s283, 128, 128, 8
        $region40: #{masked_softmax.1} parent=27 // pred_fallthru
          _
      $region28: #{masked_softmax.1} parent=5 // pred_fallthru
        _
      %p303 = scmp.le.s32.totalorder 2, %s17
      // Predicated region
      $region41: #{masked_softmax.1} parent=5 // pred_check
        %p304 = pneg %p303
      $region42: #{masked_softmax.1} parent=5 // pred_check_branch
        %306 = sbr.rel (%p304) target = $region44
      $region43: #{masked_softmax.1} parent=5 // pred_region
        %s307 = ssub.s32 %s17, 2
        // Predicated region
        $region45: #{masked_softmax.1} parent=43 // pred_check
          %p308 = pneg %p98
        $region46: #{masked_softmax.1} parent=43 // pred_check_branch
          %310 = sbr.rel (%p308) target = $region48
        $region47: #{masked_softmax.1} parent=43 // pred_region
          %s311 = sand.u32 %s83, 1
          %s312 = scalar_lea.sflag [#allocation4], %s311
          %s313 = sand.u32 %s83, 1
          %s314 = smul.addr %s313, 32
          %s315 = scalar_lea.vmem [#allocation7], %s314
          %316 = dma.done %s312, 512
        $region48: #{masked_softmax.1} parent=43 // pred_fallthru
          _
      $region44: #{masked_softmax.1} parent=5 // pred_fallthru
        _
    $region6: #{masked_softmax.1} parent=1 // loop_footer
      %s21 = sadd.s32 1, %s17
    $region7: #{masked_softmax.1} parent=1 // loop_footer_branch
      %16 = sbr.rel target = $region3
    $region8: #{masked_softmax.1} parent=1 // loop_exit
      _
    %317 = vsyncpa [#allocation3], 1
    %s318 = scalar_lea.sflag [#allocation3], 1
    %319 = vsyncpa %s318, 1
    %320 = vsyncpa [#allocation6], 1
    %s321 = scalar_lea.sflag [#allocation6], 1
    %322 = vsyncpa %s321, 1
    %323 = vsyncpa [#allocation4], 1
    %s324 = scalar_lea.sflag [#allocation4], 1
    %325 = vsyncpa %s324, 1

</llo_original>
